<compile_context>
chip_gen: v6e
topology: v6e:2x2x1
jax: 0.10.0
libtpu: 0.0.40
codegen_flags: <defaults>
</compile_context>

<pallas_src>
import functools

import jax
import jax.numpy as jnp
from jax import lax
from jax.experimental import pallas as pl
from jax.experimental.pallas import tpu as pltpu


def _round_up(v, m):
    return ((v + m - 1) // m) * m


def _pad_to(a, shape):
    pads = [(0, t - s) for s, t in zip(a.shape, shape)]
    if all(p == (0, 0) for p in pads):
        return a
    return jnp.pad(a, pads)


def _mlp_kernel(n_hidden, compute_dtype,
                x_ref, w_in_ref, b_in_ref, w_hid_ref, b_hid_ref,
                w_out_ref, b_out_ref, o_ref):
    # Hoist bias loads once per grid step (JAX does not CSE broadcasts).
    b_in = b_in_ref[...]        # (1, Hp)  f32
    b_out = b_out_ref[...]      # (1, Op)  f32

    # Input layer: Linear + ReLU (dropout is identity in eval mode / p=0.0).
    h = jnp.dot(x_ref[...].astype(compute_dtype), w_in_ref[...],
                preferred_element_type=jnp.float32)
    h = jnp.maximum(h + b_in, 0.0)

    def layer(i, h):
        w_i = w_hid_ref[i]       # (Hp, Hp)  compute_dtype, leading-dim index
        b_i = b_hid_ref[i]       # (1, Hp)   f32
        hh = jnp.dot(h.astype(compute_dtype), w_i,
                     preferred_element_type=jnp.float32)
        return jnp.maximum(hh + b_i, 0.0)

    if n_hidden <= 4:
        # Small fixed layer counts: static unroll helps the LLO scheduler.
        for i in range(n_hidden):
            h = layer(i, h)
    else:
        # Many layers: fori_loop bounds vreg live ranges / compile time.
        h = lax.fori_loop(0, n_hidden, layer, h)

    # Output layer: Linear (no activation).
    y = jnp.dot(h.astype(compute_dtype), w_out_ref[...],
                preferred_element_type=jnp.float32) + b_out
    o_ref[...] = y.astype(o_ref.dtype)
    # TODO(synk): dropout with p>0 during training would need pltpu.prng_random_bits;
    # forward here matches eval mode (and the default dropout=0.0).


def ecnet_forward(x, params, *, n_hidden, tile_b=256, compute_dtype=jnp.bfloat16):
    """Fused ECNet MLP forward: 1-D batch grid, weights VMEM-resident."""
    w_in, b_in, w_hid, b_hid, w_out, b_out = params
    batch, in_dim = x.shape
    hid = w_in.shape[1]
    out_dim = w_out.shape[1]
    n_layers = w_hid.shape[0]

    # Lane/sublane-aligned padded sizes.
    in_p = _round_up(in_dim, 128)
    hid_p = _round_up(hid, 128)
    out_p = _round_up(out_dim, 128)
    sub = 8
    tile_b = max(sub, min(tile_b, _round_up(batch, sub)))
    tile_b = _round_up(tile_b, sub)
    batch_p = _round_up(batch, tile_b)

    # Zero-pad (exact for Linear+ReLU); cast weight matrices to MXU dtype.
    x_p = _pad_to(x, (batch_p, in_p))
    w_in_p = _pad_to(w_in, (in_p, hid_p)).astype(compute_dtype)
    b_in_p = _pad_to(b_in.reshape(1, -1), (1, hid_p)).astype(jnp.float32)
    w_hid_p = _pad_to(w_hid, (n_layers, hid_p, hid_p)).astype(compute_dtype)
    b_hid_p = _pad_to(b_hid.reshape(n_layers, 1, -1),
                      (n_layers, 1, hid_p)).astype(jnp.float32)
    w_out_p = _pad_to(w_out, (hid_p, out_p)).astype(compute_dtype)
    b_out_p = _pad_to(b_out.reshape(1, -1), (1, out_p)).astype(jnp.float32)

    # VMEM budget: 2x resident weights (buffer slack) + double-buffered IO tiles
    # + a few f32 activation slabs + headroom. Clamp to 64 MiB (v7x physical).
    resident_bytes = sum(int(a.size) * a.dtype.itemsize for a in
                         (w_in_p, b_in_p, w_hid_p, b_hid_p, w_out_p, b_out_p))
    io_bytes = tile_b * (in_p + out_p) * x.dtype.itemsize
    act_bytes = tile_b * hid_p * 4
    vmem_limit = 2 * resident_bytes + 2 * io_bytes + 8 * act_bytes + (4 << 20)
    vmem_limit = int(min(max(vmem_limit, 16 << 20), 64 << 20))
    # TODO(synk): for very large hidden_dim/n_hidden the resident w_hid stack should be
    # streamed per-layer from HBM (pl.ANY + make_async_copy double buffer) on v7x.

    kernel = functools.partial(_mlp_kernel, n_hidden, compute_dtype)

    y_p = pl.pallas_call(
        kernel,
        out_shape=jax.ShapeDtypeStruct((batch_p, out_p), x.dtype),
        grid=(batch_p // tile_b,),
        in_specs=[
            pl.BlockSpec((tile_b, in_p), lambda i: (i, 0)),            # x tile
            pl.BlockSpec((in_p, hid_p), lambda i: (0, 0)),             # w_in (resident)
            pl.BlockSpec((1, hid_p), lambda i: (0, 0)),                # b_in
            pl.BlockSpec((n_layers, hid_p, hid_p), lambda i: (0, 0, 0)),  # w_hid stack
            pl.BlockSpec((n_layers, 1, hid_p), lambda i: (0, 0, 0)),   # b_hid stack
            pl.BlockSpec((hid_p, out_p), lambda i: (0, 0)),            # w_out
            pl.BlockSpec((1, out_p), lambda i: (0, 0)),                # b_out
        ],
        out_specs=pl.BlockSpec((tile_b, out_p), lambda i: (i, 0)),
        compiler_params=pltpu.CompilerParams(
            dimension_semantics=("parallel",),
            vmem_limit_bytes=vmem_limit,
        ),
    )(x_p, w_in_p, b_in_p, w_hid_p, b_hid_p, w_out_p, b_out_p)

    return y_p[:batch, :out_dim]


def init_params(key, input_dim, output_dim, hidden_dim, n_hidden):
    """Deterministic init matching PyTorch nn.Linear shapes (stored as (in, out))."""
    ks = jax.random.split(key, 6)

    def uniform(k, shape, fan_in):
        bound = 1.0 / jnp.sqrt(fan_in)
        return jax.random.uniform(k, shape, jnp.float32, -bound, bound)

    w_in = uniform(ks[0], (input_dim, hidden_dim), input_dim)
    b_in = uniform(ks[1], (1, hidden_dim), input_dim)
    w_hid = uniform(ks[2], (max(n_hidden, 1), hidden_dim, hidden_dim), hidden_dim)
    b_hid = uniform(ks[3], (max(n_hidden, 1), hidden_dim), hidden_dim)
    w_out = uniform(ks[4], (hidden_dim, output_dim), hidden_dim)
    b_out = uniform(ks[5], (1, output_dim), hidden_dim)
    return (w_in, b_in, w_hid, b_hid, w_out, b_out)


def ecnet_reference(x, params, *, n_hidden, compute_dtype=jnp.float32):
    """Pure-JAX reference (same matmul dtype discipline as the kernel)."""
    w_in, b_in, w_hid, b_hid, w_out, b_out = params
    cd = compute_dtype
    h = jnp.dot(x.astype(cd), w_in.astype(cd),
                preferred_element_type=jnp.float32) + b_in
    h = jnp.maximum(h, 0.0)
    for i in range(n_hidden):
        h = jnp.dot(h.astype(cd), w_hid[i].astype(cd),
                    preferred_element_type=jnp.float32) + b_hid[i][None, :]
        h = jnp.maximum(h, 0.0)
    return jnp.dot(h.astype(cd), w_out.astype(cd),
                   preferred_element_type=jnp.float32) + b_out


if __name__ == "__main__":
    key = jax.random.PRNGKey(0)
    k_x, k_p, k_x2, k_p2 = jax.random.split(key, 4)

    # Test 1: small shapes, f32 MXU path, statically unrolled hidden layers.
    batch, input_dim, output_dim, hidden_dim, n_hidden = 8, 16, 4, 32, 2
    x = jax.random.normal(k_x, (batch, input_dim), jnp.float32)
    params = init_params(k_p, input_dim, output_dim, hidden_dim, n_hidden)

    y = ecnet_forward(x, params, n_hidden=n_hidden, compute_dtype=jnp.float32)
    y = jax.block_until_ready(y)
    y_ref = ecnet_reference(x, params, n_hidden=n_hidden, compute_dtype=jnp.float32)
    assert y.shape == (batch, output_dim)
    assert jnp.allclose(y, y_ref, atol=1e-5, rtol=1e-5), "f32 path mismatch vs reference"

    # Test 2: batch grid > 1 (with batch padding), bf16 MXU inputs, fori_loop layer path.
    batch2, n_hidden2 = 40, 8
    x2 = jax.random.normal(k_x2, (batch2, input_dim), jnp.float32)
    params2 = init_params(k_p2, input_dim, output_dim, hidden_dim, n_hidden2)

    y2 = ecnet_forward(x2, params2, n_hidden=n_hidden2, tile_b=16,
                       compute_dtype=jnp.bfloat16)
    y2 = jax.block_until_ready(y2)
    y2_ref = ecnet_reference(x2, params2, n_hidden=n_hidden2,
                             compute_dtype=jnp.bfloat16)
    assert y2.shape == (batch2, output_dim)
    assert jnp.allclose(y2, y2_ref, atol=2e-2, rtol=2e-2), "bf16 path mismatch vs reference"

    print("KERNEL_OK")
</pallas_src>

<mosaic_0001>
module attributes {stable_mosaic.version = 11 : i64} {
  func.func @_mlp_kernel(%arg0: i32, %arg1: memref<8x128xf32, #tpu.memory_space<vmem>>, %arg2: memref<128x128xf32, #tpu.memory_space<vmem>>, %arg3: memref<1x128xf32, #tpu.memory_space<vmem>>, %arg4: memref<2x128x128xf32, #tpu.memory_space<vmem>>, %arg5: memref<2x1x128xf32, #tpu.memory_space<vmem>>, %arg6: memref<128x128xf32, #tpu.memory_space<vmem>>, %arg7: memref<1x128xf32, #tpu.memory_space<vmem>>, %arg8: memref<8x128xf32, #tpu.memory_space<vmem>>) attributes {dimension_semantics = [#tpu.dimension_semantics<parallel>], iteration_bounds = array<i64: 1>, scalar_prefetch = 0 : i64, scratch_operands = 0 : i64, tpu.core_type = #tpu.core_type<tc>, window_params = [{transform_indices = @transform_0, window_bounds = array<i64: 8, 128>}, {pipeline_mode = #tpu.pipeline_mode<synchronous>, transform_indices = @transform_1, window_bounds = array<i64: 128, 128>}, {pipeline_mode = #tpu.pipeline_mode<synchronous>, transform_indices = @transform_2, window_bounds = array<i64: 1, 128>}, {pipeline_mode = #tpu.pipeline_mode<synchronous>, transform_indices = @transform_3, window_bounds = array<i64: 2, 128, 128>}, {pipeline_mode = #tpu.pipeline_mode<synchronous>, transform_indices = @transform_4, window_bounds = array<i64: 2, 1, 128>}, {pipeline_mode = #tpu.pipeline_mode<synchronous>, transform_indices = @transform_5, window_bounds = array<i64: 128, 128>}, {pipeline_mode = #tpu.pipeline_mode<synchronous>, transform_indices = @transform_6, window_bounds = array<i64: 1, 128>}, {transform_indices = @transform_7, window_bounds = array<i64: 8, 128>}]} {
    %c0 = arith.constant 0 : index
    %c0_0 = arith.constant 0 : index
    %0 = vector.load %arg3[%c0, %c0_0] : memref<1x128xf32, #tpu.memory_space<vmem>>, vector<1x128xf32>
    %c0_1 = arith.constant 0 : index
    %c0_2 = arith.constant 0 : index
    %1 = vector.load %arg7[%c0_1, %c0_2] : memref<1x128xf32, #tpu.memory_space<vmem>>, vector<1x128xf32>
    %c0_3 = arith.constant 0 : index
    %c0_4 = arith.constant 0 : index
    %2 = vector.load %arg1[%c0_3, %c0_4] : memref<8x128xf32, #tpu.memory_space<vmem>>, vector<8x128xf32>
    %c0_5 = arith.constant 0 : index
    %c0_6 = arith.constant 0 : index
    %3 = vector.load %arg2[%c0_5, %c0_6] : memref<128x128xf32, #tpu.memory_space<vmem>>, vector<128x128xf32>
    %cst = arith.constant dense<0.000000e+00> : vector<8x128xf32>
    %4 = tpu.matmul %2, %3, %cst {dimension_numbers = #tpu.dot_dimension_numbers<[1], [0], [0], [1], [0, 0, 1, 1], [], []>} : vector<8x128xf32>, vector<128x128xf32>, vector<8x128xf32> -> vector<8x128xf32>
    %5 = vector.broadcast %0 : vector<1x128xf32> to vector<8x128xf32>
    %6 = arith.addf %4, %5 : vector<8x128xf32>
    %cst_7 = arith.constant 0.000000e+00 : f32
    %7 = vector.broadcast %cst_7 : f32 to vector<8x128xf32>
    %8 = arith.maximumf %6, %7 : vector<8x128xf32>
    %c0_8 = arith.constant 0 : index
    %c0_9 = arith.constant 0 : index
    %c0_10 = arith.constant 0 : index
    %9 = vector.load %arg4[%c0_8, %c0_9, %c0_10] : memref<2x128x128xf32, #tpu.memory_space<vmem>>, vector<1x128x128xf32>
    %10 = vector.shape_cast %9 : vector<1x128x128xf32> to vector<128x128xf32>
    %c0_11 = arith.constant 0 : index
    %c0_12 = arith.constant 0 : index
    %c0_13 = arith.constant 0 : index
    %11 = vector.load %arg5[%c0_11, %c0_12, %c0_13] : memref<2x1x128xf32, #tpu.memory_space<vmem>>, vector<1x1x128xf32>
    %12 = vector.shape_cast %11 : vector<1x1x128xf32> to vector<1x128xf32>
    %cst_14 = arith.constant dense<0.000000e+00> : vector<8x128xf32>
    %13 = tpu.matmul %8, %10, %cst_14 {dimension_numbers = #tpu.dot_dimension_numbers<[1], [0], [0], [1], [0, 0, 1, 1], [], []>} : vector<8x128xf32>, vector<128x128xf32>, vector<8x128xf32> -> vector<8x128xf32>
    %14 = vector.broadcast %12 : vector<1x128xf32> to vector<8x128xf32>
    %15 = arith.addf %13, %14 : vector<8x128xf32>
    %cst_15 = arith.constant 0.000000e+00 : f32
    %16 = vector.broadcast %cst_15 : f32 to vector<8x128xf32>
    %17 = arith.maximumf %15, %16 : vector<8x128xf32>
    %c1 = arith.constant 1 : index
    %c0_16 = arith.constant 0 : index
    %c0_17 = arith.constant 0 : index
    %18 = vector.load %arg4[%c1, %c0_16, %c0_17] : memref<2x128x128xf32, #tpu.memory_space<vmem>>, vector<1x128x128xf32>
    %19 = vector.shape_cast %18 : vector<1x128x128xf32> to vector<128x128xf32>
    %c1_18 = arith.constant 1 : index
    %c0_19 = arith.constant 0 : index
    %c0_20 = arith.constant 0 : index
    %20 = vector.load %arg5[%c1_18, %c0_19, %c0_20] : memref<2x1x128xf32, #tpu.memory_space<vmem>>, vector<1x1x128xf32>
    %21 = vector.shape_cast %20 : vector<1x1x128xf32> to vector<1x128xf32>
    %cst_21 = arith.constant dense<0.000000e+00> : vector<8x128xf32>
    %22 = tpu.matmul %17, %19, %cst_21 {dimension_numbers = #tpu.dot_dimension_numbers<[1], [0], [0], [1], [0, 0, 1, 1], [], []>} : vector<8x128xf32>, vector<128x128xf32>, vector<8x128xf32> -> vector<8x128xf32>
    %23 = vector.broadcast %21 : vector<1x128xf32> to vector<8x128xf32>
    %24 = arith.addf %22, %23 : vector<8x128xf32>
    %cst_22 = arith.constant 0.000000e+00 : f32
    %25 = vector.broadcast %cst_22 : f32 to vector<8x128xf32>
    %26 = arith.maximumf %24, %25 : vector<8x128xf32>
    %c0_23 = arith.constant 0 : index
    %c0_24 = arith.constant 0 : index
    %27 = vector.load %arg6[%c0_23, %c0_24] : memref<128x128xf32, #tpu.memory_space<vmem>>, vector<128x128xf32>
    %cst_25 = arith.constant dense<0.000000e+00> : vector<8x128xf32>
    %28 = tpu.matmul %26, %27, %cst_25 {dimension_numbers = #tpu.dot_dimension_numbers<[1], [0], [0], [1], [0, 0, 1, 1], [], []>} : vector<8x128xf32>, vector<128x128xf32>, vector<8x128xf32> -> vector<8x128xf32>
    %29 = vector.broadcast %1 : vector<1x128xf32> to vector<8x128xf32>
    %30 = arith.addf %28, %29 : vector<8x128xf32>
    %c0_26 = arith.constant 0 : index
    %c0_27 = arith.constant 0 : index
    %31 = vector.load %arg8[%c0_26, %c0_27] : memref<8x128xf32, #tpu.memory_space<vmem>>, vector<8x128xf32>
    tpu.vector_store %arg8[%c0_26, %c0_27], %30 {strides = array<i32>} : memref<8x128xf32, #tpu.memory_space<vmem>>, vector<8x128xf32>,
    return
  }
  func.func @transform_0(%arg0: i32) -> (i32, i32) {
    %c0_i32 = arith.constant 0 : i32
    %c0_i32_0 = arith.constant 0 : i32
    return %arg0, %c0_i32 : i32, i32
  }
  func.func @transform_1(%arg0: i32) -> (i32, i32) {
    %c0_i32 = arith.constant 0 : i32
    %c0_i32_0 = arith.constant 0 : i32
    %c0_i32_1 = arith.constant 0 : i32
    return %c0_i32, %c0_i32_0 : i32, i32
  }
  func.func @transform_2(%arg0: i32) -> (i32, i32) {
    %c0_i32 = arith.constant 0 : i32
    %c0_i32_0 = arith.constant 0 : i32
    %c0_i32_1 = arith.constant 0 : i32
    return %c0_i32, %c0_i32_0 : i32, i32
  }
  func.func @transform_3(%arg0: i32) -> (i32, i32, i32) {
    %c0_i32 = arith.constant 0 : i32
    %c0_i32_0 = arith.constant 0 : i32
    %c0_i32_1 = arith.constant 0 : i32
    %c0_i32_2 = arith.constant 0 : i32
    return %c0_i32, %c0_i32_0, %c0_i32_1 : i32, i32, i32
  }
  func.func @transform_4(%arg0: i32) -> (i32, i32, i32) {
    %c0_i32 = arith.constant 0 : i32
    %c0_i32_0 = arith.constant 0 : i32
    %c0_i32_1 = arith.constant 0 : i32
    %c0_i32_2 = arith.constant 0 : i32
    return %c0_i32, %c0_i32_0, %c0_i32_1 : i32, i32, i32
  }
  func.func @transform_5(%arg0: i32) -> (i32, i32) {
    %c0_i32 = arith.constant 0 : i32
    %c0_i32_0 = arith.constant 0 : i32
    %c0_i32_1 = arith.constant 0 : i32
    return %c0_i32, %c0_i32_0 : i32, i32
  }
  func.func @transform_6(%arg0: i32) -> (i32, i32) {
    %c0_i32 = arith.constant 0 : i32
    %c0_i32_0 = arith.constant 0 : i32
    %c0_i32_1 = arith.constant 0 : i32
    return %c0_i32, %c0_i32_0 : i32, i32
  }
  func.func @transform_7(%arg0: i32) -> (i32, i32) {
    %c0_i32 = arith.constant 0 : i32
    %c0_i32_0 = arith.constant 0 : i32
    return %arg0, %c0_i32 : i32, i32
  }
}

</mosaic_0001>

<llo_original>
// kernel: tpu_custom_call.1
$region0: #{tpu_custom_call.1}
  #allocation0 [shape = 'u32[]', space=smem, size = 0x4, offset = 0x4, fixed_abs, tag = 'smem constant byte address 0x4 - core index']
  #allocation1 [shape = 'u32[144,128]{1,0:T(1,128)}', space=vmem, size = 0x12000, scoped, tag = 'internal scratch']
  %s0 = inlined_call_operand.hbm [shape: f32[8,128], index: 0, kind: input, shape index: {}]
  %s1 = inlined_call_operand.hbm [shape: f32[128,128], index: 1, kind: input, shape index: {}]
  %s2 = inlined_call_operand.vmem [shape: f32[1,128], index: 2, kind: input, shape index: {}]
  %s3 = inlined_call_operand.hbm [shape: f32[2,128,128], index: 3, kind: input, shape index: {}]
  %s4 = inlined_call_operand.vmem [shape: f32[2,1,128], index: 4, kind: input, shape index: {}]
  %s5 = inlined_call_operand.hbm [shape: f32[128,128], index: 5, kind: input, shape index: {}]
  %s6 = inlined_call_operand.vmem [shape: f32[1,128], index: 6, kind: input, shape index: {}]
  %s7 = inlined_call_operand.hbm [shape: f32[8,128], index: 7, kind: output, shape index: {}]
  %s8 = sld [smem:[#allocation0]]
  $region54: #{tpu_custom_call.1} parent=0
    _
  %s10 = ssub.s32 1, %s8
  %s11 = scalar_select 0, %s10, %s8
  $region1: #{tpu_custom_call.1} parent=0
    #allocation2 [shape = 'u8[4096]{0}', space=vmem, size = 0x1000, scoped, tag = 'input window, operand 0, single buffered']
    #allocation3 [shape = 's32[1]{0}', space=sflag, size = 0x4, scoped, tag = 'scoped memory for tpu_custom_call.1']
    #allocation4 [shape = 's32[1]{0}', space=sflag, size = 0x4, scoped, tag = 'scoped memory for tpu_custom_call.1']
    #allocation5 [shape = 'u8[65536]{0}', space=vmem, size = 0x10000, scoped, tag = 'input window, operand 1, single buffered']
    #allocation6 [shape = 's32[1]{0}', space=sflag, size = 0x4, scoped, tag = 'scoped memory for tpu_custom_call.1']
    #allocation7 [shape = 'u8[131072]{0}', space=vmem, size = 0x20000, scoped, tag = 'input window, operand 3, single buffered']
    #allocation8 [shape = 'u8[65536]{0}', space=vmem, size = 0x10000, scoped, tag = 'input window, operand 5, single buffered']
    #allocation9 [shape = 's32[1]{0}', space=sflag, size = 0x4, scoped, tag = 'scoped memory for tpu_custom_call.1']
    #allocation10 [shape = 'u8[4096]{0}', space=vmem, size = 0x1000, scoped, tag = 'output window, operand 0, single buffered']
    %12 = vsyncpa [#allocation3], 0
    %13 = vsyncpa [#allocation6], 0
    %14 = vsyncpa [#allocation9], 0
    %15 = vsyncpa [#allocation4], 0
    // Predicated region
    $region2: #{tpu_custom_call.1} parent=1 // pred_check
      _
    $region3: #{tpu_custom_call.1} parent=1 // pred_check_branch
      %17 = sbr.rel (0) target = $region5
    $region4: #{tpu_custom_call.1} parent=1 // pred_region
      %s19 = ssub.s32 128, 128
      %20 = vsyncadd [#allocation3], %s19
      %s22 = sshll.u32 [#allocation2], 4
      %s23 = int_to_ptr.vmem [resolvable:$true] %s22
      %25 = dma.hbm_to_vmem [thread:$0]  %s0, 128, %s23, [#allocation3]
    $region5: #{tpu_custom_call.1} parent=1 // pred_fallthru
      _
    // Predicated region
    $region6: #{tpu_custom_call.1} parent=1 // pred_check
      _
    $region7: #{tpu_custom_call.1} parent=1 // pred_check_branch
      %27 = sbr.rel (0) target = $region9
    $region8: #{tpu_custom_call.1} parent=1 // pred_region
      %s29 = ssub.s32 2048, 2048
      %30 = vsyncadd [#allocation6], %s29
      %s31 = sshll.u32 [#allocation5], 4
      %s32 = int_to_ptr.vmem [resolvable:$true] %s31
      %37 = dma.hbm_to_vmem [thread:$0]  %s1, 2048, %s32, [#allocation6], 128, 128, 8
    $region9: #{tpu_custom_call.1} parent=1 // pred_fallthru
      _
    // Predicated region
    $region10: #{tpu_custom_call.1} parent=1 // pred_check
      _
    $region11: #{tpu_custom_call.1} parent=1 // pred_check_branch
      %39 = sbr.rel (0) target = $region13
    $region12: #{tpu_custom_call.1} parent=1 // pred_region
      _
    $region13: #{tpu_custom_call.1} parent=1 // pred_fallthru
      _
    // Predicated region
    $region14: #{tpu_custom_call.1} parent=1 // pred_check
      _
    $region15: #{tpu_custom_call.1} parent=1 // pred_check_branch
      %41 = sbr.rel (0) target = $region17
    $region16: #{tpu_custom_call.1} parent=1 // pred_region
      %s43 = ssub.s32 4096, 4096
      %44 = vsyncadd [#allocation6], %s43
      %s45 = sshll.u32 [#allocation7], 4
      %s46 = int_to_ptr.vmem [resolvable:$true] %s45
      %51 = dma.hbm_to_vmem [thread:$0]  %s3, 4096, %s46, [#allocation6], 128, 128, 8
    $region17: #{tpu_custom_call.1} parent=1 // pred_fallthru
      _
    // Predicated region
    $region18: #{tpu_custom_call.1} parent=1 // pred_check
      _
    $region19: #{tpu_custom_call.1} parent=1 // pred_check_branch
      %53 = sbr.rel (0) target = $region21
    $region20: #{tpu_custom_call.1} parent=1 // pred_region
      _
    $region21: #{tpu_custom_call.1} parent=1 // pred_fallthru
      _
    // Predicated region
    $region22: #{tpu_custom_call.1} parent=1 // pred_check
      _
    $region23: #{tpu_custom_call.1} parent=1 // pred_check_branch
      %55 = sbr.rel (0) target = $region25
    $region24: #{tpu_custom_call.1} parent=1 // pred_region
      %s57 = ssub.s32 2048, 2048
      %58 = vsyncadd [#allocation9], %s57
      %s59 = sshll.u32 [#allocation8], 4
      %s60 = int_to_ptr.vmem [resolvable:$true] %s59
      %65 = dma.hbm_to_vmem [thread:$0]  %s5, 2048, %s60, [#allocation9], 128, 128, 8
    $region25: #{tpu_custom_call.1} parent=1 // pred_fallthru
      _
    // Predicated region
    $region26: #{tpu_custom_call.1} parent=1 // pred_check
      _
    $region27: #{tpu_custom_call.1} parent=1 // pred_check_branch
      %67 = sbr.rel (0) target = $region29
    $region28: #{tpu_custom_call.1} parent=1 // pred_region
      _
    $region29: #{tpu_custom_call.1} parent=1 // pred_fallthru
      _
    // Predicated region
    $region30: #{tpu_custom_call.1} parent=1 // pred_check
      _
    $region31: #{tpu_custom_call.1} parent=1 // pred_check_branch
      %69 = sbr.rel (0) target = $region33
    $region32: #{tpu_custom_call.1} parent=1 // pred_region
      %70 = dma.done [#allocation3], 128
    $region33: #{tpu_custom_call.1} parent=1 // pred_fallthru
      _
    // Predicated region
    $region34: #{tpu_custom_call.1} parent=1 // pred_check
      _
    $region35: #{tpu_custom_call.1} parent=1 // pred_check_branch
      %72 = sbr.rel (0) target = $region37
    $region36: #{tpu_custom_call.1} parent=1 // pred_region
      %73 = dma.done [#allocation6], 2048
    $region37: #{tpu_custom_call.1} parent=1 // pred_fallthru
      _
    // Predicated region
    $region38: #{tpu_custom_call.1} parent=1 // pred_check
      _
    $region39: #{tpu_custom_call.1} parent=1 // pred_check_branch
      %75 = sbr.rel (0) target = $region41
    $region40: #{tpu_custom_call.1} parent=1 // pred_region
      %76 = dma.done [#allocation6], 4096
    $region41: #{tpu_custom_call.1} parent=1 // pred_fallthru
      _
    // Predicated region
    $region42: #{tpu_custom_call.1} parent=1 // pred_check
      _
    $region43: #{tpu_custom_call.1} parent=1 // pred_check_branch
      %78 = sbr.rel (0) target = $region45
    $region44: #{tpu_custom_call.1} parent=1 // pred_region
      %79 = dma.done [#allocation9], 2048
    $region45: #{tpu_custom_call.1} parent=1 // pred_fallthru
      _
    %v80 = vld [vmem:[%s2] sm:$0x1]
    %v81 = vld [vmem:[%s6] sm:$0x1]
    %v82 = vld [vmem:[#allocation2] sm:$0xff]
    %v83 = vld [vmem:[#allocation5] sm:$0xff]
    %v84 = vld [vmem:[#allocation5 + $0x8] sm:$0xff]
    %v85 = vld [vmem:[#allocation5 + $0x10] sm:$0xff]
    %v86 = vld [vmem:[#allocation5 + $0x18] sm:$0xff]
    %v87 = vld [vmem:[#allocation5 + $0x20] sm:$0xff]
    %v88 = vld [vmem:[#allocation5 + $0x28] sm:$0xff]
    %v89 = vld [vmem:[#allocation5 + $0x30] sm:$0xff]
    %v90 = vld [vmem:[#allocation5 + $0x38] sm:$0xff]
    %v91 = vld [vmem:[#allocation5 + $0x40] sm:$0xff]
    %v92 = vld [vmem:[#allocation5 + $0x48] sm:$0xff]
    %v93 = vld [vmem:[#allocation5 + $0x50] sm:$0xff]
    %v94 = vld [vmem:[#allocation5 + $0x58] sm:$0xff]
    %v95 = vld [vmem:[#allocation5 + $0x60] sm:$0xff]
    %v96 = vld [vmem:[#allocation5 + $0x68] sm:$0xff]
    %v97 = vld [vmem:[#allocation5 + $0x70] sm:$0xff]
    %v98 = vld [vmem:[#allocation5 + $0x78] sm:$0xff]
    %v100 = vlaneseq
    %v101 = vshrl.u32 %v100, 7
    %v102 = vsub.s32 0, %v101
    %v103 = vrot.slane %v80, %v102
    %105 = vmatprep.subr.mxu0 0.0
    %106 = vmatpush1.msra.mxu0 %v98
    %107 = vmatprep.subr.mxu0 0.0
    %108 = vmatpush1.msra.mxu0 %v97
    %109 = vmatprep.subr.mxu0 0.0
    %110 = vmatpush1.msra.mxu0 %v96
    %111 = vmatprep.subr.mxu0 0.0
    %112 = vmatpush1.msra.mxu0 %v95
    %113 = vmatprep.subr.mxu0 0.0
    %114 = vmatpush1.msra.mxu0 %v94
    %115 = vmatprep.subr.mxu0 0.0
    %116 = vmatpush1.msra.mxu0 %v93
    %117 = vmatprep.subr.mxu0 0.0
    %118 = vmatpush1.msra.mxu0 %v92
    %119 = vmatprep.subr.mxu0 0.0
    %120 = vmatpush1.msra.mxu0 %v91
    %121 = vmatprep.subr.mxu0 0.0
    %122 = vmatpush1.msra.mxu0 %v90
    %123 = vmatprep.subr.mxu0 0.0
    %124 = vmatpush1.msra.mxu0 %v89
    %125 = vmatprep.subr.mxu0 0.0
    %126 = vmatpush1.msra.mxu0 %v88
    %127 = vmatprep.subr.mxu0 0.0
    %128 = vmatpush1.msra.mxu0 %v87
    %129 = vmatprep.subr.mxu0 0.0
    %130 = vmatpush1.msra.mxu0 %v86
    %131 = vmatprep.subr.mxu0 0.0
    %132 = vmatpush1.msra.mxu0 %v85
    %133 = vmatprep.subr.mxu0 0.0
    %134 = vmatpush1.msra.mxu0 %v84
    %135 = vmatprep.subr.mxu0 0.0
    %136 = vmatpush1.msra.mxu0 %v83
    %137 = vmatprep.subr.mxu0 0.0
    %138 = vmatpush2.msra.mxu0 0.0
    %139 = vmatprep.subr.mxu0 0.0
    %140 = vmatpush2.msra.mxu0 0.0
    %141 = vmatprep.subr.mxu0 0.0
    %142 = vmatpush2.msra.mxu0 0.0
    %143 = vmatprep.subr.mxu0 0.0
    %144 = vmatpush2.msra.mxu0 0.0
    %145 = vmatprep.subr.mxu0 0.0
    %146 = vmatpush2.msra.mxu0 0.0
    %147 = vmatprep.subr.mxu0 0.0
    %148 = vmatpush2.msra.mxu0 0.0
    %149 = vmatprep.subr.mxu0 0.0
    %150 = vmatpush2.msra.mxu0 0.0
    %151 = vmatprep.subr.mxu0 0.0
    %152 = vmatpush2.msra.mxu0 0.0
    %153 = vmatprep.subr.mxu0 0.0
    %154 = vmatpush2.msra.mxu0 0.0
    %155 = vmatprep.subr.mxu0 0.0
    %156 = vmatpush2.msra.mxu0 0.0
    %157 = vmatprep.subr.mxu0 0.0
    %158 = vmatpush2.msra.mxu0 0.0
    %159 = vmatprep.subr.mxu0 0.0
    %160 = vmatpush2.msra.mxu0 0.0
    %161 = vmatprep.subr.mxu0 0.0
    %162 = vmatpush2.msra.mxu0 0.0
    %163 = vmatprep.subr.mxu0 0.0
    %164 = vmatpush2.msra.mxu0 0.0
    %165 = vmatprep.subr.mxu0 0.0
    %166 = vmatpush2.msra.mxu0 0.0
    %167 = vmatprep.subr.mxu0 0.0
    %168 = vmatpush2.msra.mxu0 0.0
    %169 = vmatprep.mubr.f32.mxu0 0.0
    %170 = vmatmul.mubr.f32.gmra.mxu0 %v82
    %v171 = vpop.f32.mrf.mxu0
    %v172 = vadd.f32 %v103, %v171
    %v173 = vpop.f32.mrf.mxu0
    %174 = vdwg.mxu0
    %v175 = vmax.f32 %v172, 0.0
    %v176 = vld [vmem:[#allocation7] sm:$0xff]
    %v177 = vld [vmem:[#allocation7 + $0x8] sm:$0xff]
    %v178 = vld [vmem:[#allocation7 + $0x10] sm:$0xff]
    %v179 = vld [vmem:[#allocation7 + $0x18] sm:$0xff]
    %v180 = vld [vmem:[#allocation7 + $0x20] sm:$0xff]
    %v181 = vld [vmem:[#allocation7 + $0x28] sm:$0xff]
    %v182 = vld [vmem:[#allocation7 + $0x30] sm:$0xff]
    %v183 = vld [vmem:[#allocation7 + $0x38] sm:$0xff]
    %v184 = vld [vmem:[#allocation7 + $0x40] sm:$0xff]
    %v185 = vld [vmem:[#allocation7 + $0x48] sm:$0xff]
    %v186 = vld [vmem:[#allocation7 + $0x50] sm:$0xff]
    %v187 = vld [vmem:[#allocation7 + $0x58] sm:$0xff]
    %v188 = vld [vmem:[#allocation7 + $0x60] sm:$0xff]
    %v189 = vld [vmem:[#allocation7 + $0x68] sm:$0xff]
    %v190 = vld [vmem:[#allocation7 + $0x70] sm:$0xff]
    %v191 = vld [vmem:[#allocation7 + $0x78] sm:$0xff]
    %v192 = vld [vmem:[%s4] sm:$0x1]
    %v194 = vlaneseq
    %v195 = vshrl.u32 %v194, 7
    %v196 = vsub.s32 0, %v195
    %v197 = vrot.slane %v192, %v196
    %199 = vmatprep.subr.mxu0 0.0
    %200 = vmatpush1.msra.mxu0 %v191
    %201 = vmatprep.subr.mxu0 0.0
    %202 = vmatpush1.msra.mxu0 %v190
    %203 = vmatprep.subr.mxu0 0.0
    %204 = vmatpush1.msra.mxu0 %v189
    %205 = vmatprep.subr.mxu0 0.0
    %206 = vmatpush1.msra.mxu0 %v188
    %207 = vmatprep.subr.mxu0 0.0
    %208 = vmatpush1.msra.mxu0 %v187
    %209 = vmatprep.subr.mxu0 0.0
    %210 = vmatpush1.msra.mxu0 %v186
    %211 = vmatprep.subr.mxu0 0.0
    %212 = vmatpush1.msra.mxu0 %v185
    %213 = vmatprep.subr.mxu0 0.0
    %214 = vmatpush1.msra.mxu0 %v184
    %215 = vmatprep.subr.mxu0 0.0
    %216 = vmatpush1.msra.mxu0 %v183
    %217 = vmatprep.subr.mxu0 0.0
    %218 = vmatpush1.msra.mxu0 %v182
    %219 = vmatprep.subr.mxu0 0.0
    %220 = vmatpush1.msra.mxu0 %v181
    %221 = vmatprep.subr.mxu0 0.0
    %222 = vmatpush1.msra.mxu0 %v180
    %223 = vmatprep.subr.mxu0 0.0
    %224 = vmatpush1.msra.mxu0 %v179
    %225 = vmatprep.subr.mxu0 0.0
    %226 = vmatpush1.msra.mxu0 %v178
    %227 = vmatprep.subr.mxu0 0.0
    %228 = vmatpush1.msra.mxu0 %v177
    %229 = vmatprep.subr.mxu0 0.0
    %230 = vmatpush1.msra.mxu0 %v176
    %231 = vmatprep.subr.mxu0 0.0
    %232 = vmatpush2.msra.mxu0 0.0
    %233 = vmatprep.subr.mxu0 0.0
    %234 = vmatpush2.msra.mxu0 0.0
    %235 = vmatprep.subr.mxu0 0.0
    %236 = vmatpush2.msra.mxu0 0.0
    %237 = vmatprep.subr.mxu0 0.0
    %238 = vmatpush2.msra.mxu0 0.0
    %239 = vmatprep.subr.mxu0 0.0
    %240 = vmatpush2.msra.mxu0 0.0
    %241 = vmatprep.subr.mxu0 0.0
    %242 = vmatpush2.msra.mxu0 0.0
    %243 = vmatprep.subr.mxu0 0.0
    %244 = vmatpush2.msra.mxu0 0.0
    %245 = vmatprep.subr.mxu0 0.0
    %246 = vmatpush2.msra.mxu0 0.0
    %247 = vmatprep.subr.mxu0 0.0
    %248 = vmatpush2.msra.mxu0 0.0
    %249 = vmatprep.subr.mxu0 0.0
    %250 = vmatpush2.msra.mxu0 0.0
    %251 = vmatprep.subr.mxu0 0.0
    %252 = vmatpush2.msra.mxu0 0.0
    %253 = vmatprep.subr.mxu0 0.0
    %254 = vmatpush2.msra.mxu0 0.0
    %255 = vmatprep.subr.mxu0 0.0
    %256 = vmatpush2.msra.mxu0 0.0
    %257 = vmatprep.subr.mxu0 0.0
    %258 = vmatpush2.msra.mxu0 0.0
    %259 = vmatprep.subr.mxu0 0.0
    %260 = vmatpush2.msra.mxu0 0.0
    %261 = vmatprep.subr.mxu0 0.0
    %262 = vmatpush2.msra.mxu0 0.0
    %263 = vmatprep.mubr.f32.mxu0 0.0
    %264 = vmatmul.mubr.f32.gmra.mxu0 %v175
    %v265 = vpop.f32.mrf.mxu0
    %v266 = vadd.f32 %v197, %v265
    %v267 = vpop.f32.mrf.mxu0
    %268 = vdwg.mxu0
    %v269 = vmax.f32 %v266, 0.0
    %s270 = scalar_lea.vmem [#allocation7], 128
    %v271 = vld [vmem:[%s270] sm:$0xff]
    %v272 = vld [vmem:[%s270 + $0x8] sm:$0xff]
    %v273 = vld [vmem:[%s270 + $0x10] sm:$0xff]
    %v274 = vld [vmem:[%s270 + $0x18] sm:$0xff]
    %v275 = vld [vmem:[%s270 + $0x20] sm:$0xff]
    %v276 = vld [vmem:[%s270 + $0x28] sm:$0xff]
    %v277 = vld [vmem:[%s270 + $0x30] sm:$0xff]
    %v278 = vld [vmem:[%s270 + $0x38] sm:$0xff]
    %v279 = vld [vmem:[%s270 + $0x40] sm:$0xff]
    %v280 = vld [vmem:[%s270 + $0x48] sm:$0xff]
    %v281 = vld [vmem:[%s270 + $0x50] sm:$0xff]
    %v282 = vld [vmem:[%s270 + $0x58] sm:$0xff]
    %v283 = vld [vmem:[%s270 + $0x60] sm:$0xff]
    %v284 = vld [vmem:[%s270 + $0x68] sm:$0xff]
    %v285 = vld [vmem:[%s270 + $0x70] sm:$0xff]
    %v286 = vld [vmem:[%s270 + $0x78] sm:$0xff]
    %s287 = scalar_lea.vmem %s4, 1
    %v288 = vld [vmem:[%s287] sm:$0x1]
    %v290 = vlaneseq
    %v291 = vshrl.u32 %v290, 7
    %v292 = vsub.s32 0, %v291
    %v293 = vrot.slane %v288, %v292
    %295 = vmatprep.subr.mxu0 0.0
    %296 = vmatpush1.msra.mxu0 %v286
    %297 = vmatprep.subr.mxu0 0.0
    %298 = vmatpush1.msra.mxu0 %v285
    %299 = vmatprep.subr.mxu0 0.0
    %300 = vmatpush1.msra.mxu0 %v284
    %301 = vmatprep.subr.mxu0 0.0
    %302 = vmatpush1.msra.mxu0 %v283
    %303 = vmatprep.subr.mxu0 0.0
    %304 = vmatpush1.msra.mxu0 %v282
    %305 = vmatprep.subr.mxu0 0.0
    %306 = vmatpush1.msra.mxu0 %v281
    %307 = vmatprep.subr.mxu0 0.0
    %308 = vmatpush1.msra.mxu0 %v280
    %309 = vmatprep.subr.mxu0 0.0
    %310 = vmatpush1.msra.mxu0 %v279
    %311 = vmatprep.subr.mxu0 0.0
    %312 = vmatpush1.msra.mxu0 %v278
    %313 = vmatprep.subr.mxu0 0.0
    %314 = vmatpush1.msra.mxu0 %v277
    %315 = vmatprep.subr.mxu0 0.0
    %316 = vmatpush1.msra.mxu0 %v276
    %317 = vmatprep.subr.mxu0 0.0
    %318 = vmatpush1.msra.mxu0 %v275
    %319 = vmatprep.subr.mxu0 0.0
    %320 = vmatpush1.msra.mxu0 %v274
    %321 = vmatprep.subr.mxu0 0.0
    %322 = vmatpush1.msra.mxu0 %v273
    %323 = vmatprep.subr.mxu0 0.0
    %324 = vmatpush1.msra.mxu0 %v272
    %325 = vmatprep.subr.mxu0 0.0
    %326 = vmatpush1.msra.mxu0 %v271
    %327 = vmatprep.subr.mxu0 0.0
    %328 = vmatpush2.msra.mxu0 0.0
    %329 = vmatprep.subr.mxu0 0.0
    %330 = vmatpush2.msra.mxu0 0.0
    %331 = vmatprep.subr.mxu0 0.0
    %332 = vmatpush2.msra.mxu0 0.0
    %333 = vmatprep.subr.mxu0 0.0
    %334 = vmatpush2.msra.mxu0 0.0
    %335 = vmatprep.subr.mxu0 0.0
    %336 = vmatpush2.msra.mxu0 0.0
    %337 = vmatprep.subr.mxu0 0.0
    %338 = vmatpush2.msra.mxu0 0.0
    %339 = vmatprep.subr.mxu0 0.0
    %340 = vmatpush2.msra.mxu0 0.0
    %341 = vmatprep.subr.mxu0 0.0
    %342 = vmatpush2.msra.mxu0 0.0
    %343 = vmatprep.subr.mxu0 0.0
    %344 = vmatpush2.msra.mxu0 0.0
    %345 = vmatprep.subr.mxu0 0.0
    %346 = vmatpush2.msra.mxu0 0.0
    %347 = vmatprep.subr.mxu0 0.0
    %348 = vmatpush2.msra.mxu0 0.0
    %349 = vmatprep.subr.mxu0 0.0
    %350 = vmatpush2.msra.mxu0 0.0
    %351 = vmatprep.subr.mxu0 0.0
    %352 = vmatpush2.msra.mxu0 0.0
    %353 = vmatprep.subr.mxu0 0.0
    %354 = vmatpush2.msra.mxu0 0.0
    %355 = vmatprep.subr.mxu0 0.0
    %356 = vmatpush2.msra.mxu0 0.0
    %357 = vmatprep.subr.mxu0 0.0
    %358 = vmatpush2.msra.mxu0 0.0
    %359 = vmatprep.mubr.f32.mxu0 0.0
    %360 = vmatmul.mubr.f32.gmra.mxu0 %v269
    %v361 = vpop.f32.mrf.mxu0
    %v362 = vadd.f32 %v293, %v361
    %v363 = vpop.f32.mrf.mxu0
    %364 = vdwg.mxu0
    %v365 = vmax.f32 %v362, 0.0
    %v366 = vld [vmem:[#allocation8] sm:$0xff]
    %v367 = vld [vmem:[#allocation8 + $0x8] sm:$0xff]
    %v368 = vld [vmem:[#allocation8 + $0x10] sm:$0xff]
    %v369 = vld [vmem:[#allocation8 + $0x18] sm:$0xff]
    %v370 = vld [vmem:[#allocation8 + $0x20] sm:$0xff]
    %v371 = vld [vmem:[#allocation8 + $0x28] sm:$0xff]
    %v372 = vld [vmem:[#allocation8 + $0x30] sm:$0xff]
    %v373 = vld [vmem:[#allocation8 + $0x38] sm:$0xff]
    %v374 = vld [vmem:[#allocation8 + $0x40] sm:$0xff]
    %v375 = vld [vmem:[#allocation8 + $0x48] sm:$0xff]
    %v376 = vld [vmem:[#allocation8 + $0x50] sm:$0xff]
    %v377 = vld [vmem:[#allocation8 + $0x58] sm:$0xff]
    %v378 = vld [vmem:[#allocation8 + $0x60] sm:$0xff]
    %v379 = vld [vmem:[#allocation8 + $0x68] sm:$0xff]
    %v380 = vld [vmem:[#allocation8 + $0x70] sm:$0xff]
    %v381 = vld [vmem:[#allocation8 + $0x78] sm:$0xff]
    %v383 = vlaneseq
    %v384 = vshrl.u32 %v383, 7
    %v385 = vsub.s32 0, %v384
    %v386 = vrot.slane %v81, %v385
    %388 = vmatprep.subr.mxu0 0.0
    %389 = vmatpush1.msra.mxu0 %v381
    %390 = vmatprep.subr.mxu0 0.0
    %391 = vmatpush1.msra.mxu0 %v380
    %392 = vmatprep.subr.mxu0 0.0
    %393 = vmatpush1.msra.mxu0 %v379
    %394 = vmatprep.subr.mxu0 0.0
    %395 = vmatpush1.msra.mxu0 %v378
    %396 = vmatprep.subr.mxu0 0.0
    %397 = vmatpush1.msra.mxu0 %v377
    %398 = vmatprep.subr.mxu0 0.0
    %399 = vmatpush1.msra.mxu0 %v376
    %400 = vmatprep.subr.mxu0 0.0
    %401 = vmatpush1.msra.mxu0 %v375
    %402 = vmatprep.subr.mxu0 0.0
    %403 = vmatpush1.msra.mxu0 %v374
    %404 = vmatprep.subr.mxu0 0.0
    %405 = vmatpush1.msra.mxu0 %v373
    %406 = vmatprep.subr.mxu0 0.0
    %407 = vmatpush1.msra.mxu0 %v372
    %408 = vmatprep.subr.mxu0 0.0
    %409 = vmatpush1.msra.mxu0 %v371
    %410 = vmatprep.subr.mxu0 0.0
    %411 = vmatpush1.msra.mxu0 %v370
    %412 = vmatprep.subr.mxu0 0.0
    %413 = vmatpush1.msra.mxu0 %v369
    %414 = vmatprep.subr.mxu0 0.0
    %415 = vmatpush1.msra.mxu0 %v368
    %416 = vmatprep.subr.mxu0 0.0
    %417 = vmatpush1.msra.mxu0 %v367
    %418 = vmatprep.subr.mxu0 0.0
    %419 = vmatpush1.msra.mxu0 %v366
    %420 = vmatprep.subr.mxu0 0.0
    %421 = vmatpush2.msra.mxu0 0.0
    %422 = vmatprep.subr.mxu0 0.0
    %423 = vmatpush2.msra.mxu0 0.0
    %424 = vmatprep.subr.mxu0 0.0
    %425 = vmatpush2.msra.mxu0 0.0
    %426 = vmatprep.subr.mxu0 0.0
    %427 = vmatpush2.msra.mxu0 0.0
    %428 = vmatprep.subr.mxu0 0.0
    %429 = vmatpush2.msra.mxu0 0.0
    %430 = vmatprep.subr.mxu0 0.0
    %431 = vmatpush2.msra.mxu0 0.0
    %432 = vmatprep.subr.mxu0 0.0
    %433 = vmatpush2.msra.mxu0 0.0
    %434 = vmatprep.subr.mxu0 0.0
    %435 = vmatpush2.msra.mxu0 0.0
    %436 = vmatprep.subr.mxu0 0.0
    %437 = vmatpush2.msra.mxu0 0.0
    %438 = vmatprep.subr.mxu0 0.0
    %439 = vmatpush2.msra.mxu0 0.0
    %440 = vmatprep.subr.mxu0 0.0
    %441 = vmatpush2.msra.mxu0 0.0
    %442 = vmatprep.subr.mxu0 0.0
    %443 = vmatpush2.msra.mxu0 0.0
    %444 = vmatprep.subr.mxu0 0.0
    %445 = vmatpush2.msra.mxu0 0.0
    %446 = vmatprep.subr.mxu0 0.0
    %447 = vmatpush2.msra.mxu0 0.0
    %448 = vmatprep.subr.mxu0 0.0
    %449 = vmatpush2.msra.mxu0 0.0
    %450 = vmatprep.subr.mxu0 0.0
    %451 = vmatpush2.msra.mxu0 0.0
    %452 = vmatprep.mubr.f32.mxu0 0.0
    %453 = vmatmul.mubr.f32.gmra.mxu0 %v365
    %v454 = vpop.f32.mrf.mxu0
    %v455 = vadd.f32 %v386, %v454
    %v456 = vpop.f32.mrf.mxu0
    %457 = vdwg.mxu0
    %458 = vst [vmem:[#allocation10] sm:$0xff] %v455
    // Predicated region
    $region46: #{tpu_custom_call.1} parent=1 // pred_check
      _
    $region47: #{tpu_custom_call.1} parent=1 // pred_check_branch
      %460 = sbr.rel (0) target = $region49
    $region48: #{tpu_custom_call.1} parent=1 // pred_region
      %s462 = ssub.s32 128, 128
      %463 = vsyncadd [#allocation4], %s462
      %s465 = sshll.u32 [#allocation10], 4
      %s466 = int_to_ptr.vmem [resolvable:$true] %s465
      %468 = dma.vmem_to_hbm [thread:$0]  %s466, 128, %s7, [#allocation4]
    $region49: #{tpu_custom_call.1} parent=1 // pred_fallthru
      _
    // Predicated region
    $region50: #{tpu_custom_call.1} parent=1 // pred_check
      _
    $region51: #{tpu_custom_call.1} parent=1 // pred_check_branch
      %470 = sbr.rel (0) target = $region53
    $region52: #{tpu_custom_call.1} parent=1 // pred_region
      %471 = dma.done [#allocation4], 128
    $region53: #{tpu_custom_call.1} parent=1 // pred_fallthru
      _
    %472 = vsyncpa [#allocation3], 1
    %473 = vsyncpa [#allocation6], 1
    %474 = vsyncpa [#allocation9], 1
    %475 = vsyncpa [#allocation4], 1

</llo_original>
